<compile_context>
chip_gen: v7x
topology: tpu7x:2x2x1
jax: 0.10.0
libtpu: 0.0.40
codegen_flags: <defaults>
</compile_context>

<pallas_src>
from functools import partial

import numpy as np
import jax
import jax.numpy as jnp
from jax.experimental import pallas as pl
from jax.experimental.pallas import tpu as pltpu


# -----------------------------------------------------------------------------
# Pallas kernel: the lightfield MLP (the compute-heavy part of the forward).
# -----------------------------------------------------------------------------
def _lightfield_mlp_kernel(x_ref, w1_ref, b1_ref, w2_ref, b2_ref,
                           w3_ref, b3_ref, o_ref):
    # x / W* are bf16 (full MXU rate); accumulation and all VPU/EUP work is f32.
    x = x_ref[...]
    h1 = jnp.dot(x, w1_ref[...], preferred_element_type=jnp.float32)
    h1 = jnp.maximum(h1 + b1_ref[...], 0.0)
    h1 = h1.astype(jnp.bfloat16)
    h2 = jnp.dot(h1, w2_ref[...], preferred_element_type=jnp.float32)
    h2 = jnp.maximum(h2 + b2_ref[...], 0.0)
    h2 = h2.astype(jnp.bfloat16)
    o = jnp.dot(h2, w3_ref[...], preferred_element_type=jnp.float32) + b3_ref[...]
    o_ref[...] = jax.nn.sigmoid(o)


def _round_up(n, m):
    return ((n + m - 1) // m) * m


def _choose_tile_rows(rows, target=1024):
    """Pick a row tile: big enough to amortize pipeline/MXU-fill overhead,
    but keep >= 2 grid steps when possible so v7x shards across both TCs."""
    if rows <= 16:
        return 8
    if rows <= 2 * target:
        return max(8, _round_up(pl.cdiv(rows, 2), 8))
    return target


def lightfield_mlp_pallas(x_bf16, params, *, tile_rows=None):
    """x_bf16: (rows, F) bfloat16; returns (rows, Hout) float32 (sigmoid)."""
    rows, F = x_bf16.shape
    W1, b1, W2, b2, W3, b3 = params          # W*: bf16, b*: f32
    H = W1.shape[1]
    Hout = W3.shape[1]
    assert F % 128 == 0 and H % 128 == 0 and Hout % 128 == 0

    if tile_rows is None:
        tile_rows = _choose_tile_rows(rows)
    padded_rows = _round_up(rows, tile_rows)
    if padded_rows != rows:
        x_bf16 = jnp.pad(x_bf16, ((0, padded_rows - rows), (0, 0)))

    grid = (padded_rows // tile_rows,)

    weight_bytes = 2 * (F * H + H * H + H * Hout) + 4 * (2 * H + Hout)
    cost = pl.CostEstimate(
        flops=2 * padded_rows * (F * H + H * H + H * Hout),
        transcendentals=padded_rows * Hout,          # sigmoid head
        bytes_accessed=padded_rows * F * 2 + padded_rows * Hout * 4 + weight_bytes,
    )

    out = pl.pallas_call(
        _lightfield_mlp_kernel,
        out_shape=jax.ShapeDtypeStruct((padded_rows, Hout), jnp.float32),
        grid_spec=pltpu.PrefetchScalarGridSpec(
            num_scalar_prefetch=0,
            grid=grid,
            in_specs=[
                pl.BlockSpec((tile_rows, F), lambda i: (i, 0)),
                pl.BlockSpec((F, H), lambda i: (0, 0)),
                pl.BlockSpec((1, H), lambda i: (0, 0)),
                pl.BlockSpec((H, H), lambda i: (0, 0)),
                pl.BlockSpec((1, H), lambda i: (0, 0)),
                pl.BlockSpec((H, Hout), lambda i: (0, 0)),
                pl.BlockSpec((1, Hout), lambda i: (0, 0)),
            ],
            out_specs=pl.BlockSpec((tile_rows, Hout), lambda i: (i, 0)),
        ),
        compiler_params=pltpu.CompilerParams(
            dimension_semantics=("parallel",),
            # Budget safe on v7x (64 MiB physical / 32 MiB scoped); actual use
            # at tile_rows=1024 is ~2 MiB, so double-buffering always survives.
            vmem_limit_bytes=32 << 20,
        ),
        cost_estimate=cost,
    )(x_bf16, W1, b1.reshape(1, H), W2, b2.reshape(1, H), W3, b3.reshape(1, Hout))
    if padded_rows != rows:
        out = out[:rows]
    return out


# -----------------------------------------------------------------------------
# Synthetic lightfield model wrapper (mirrors `model(x, ray_dirs, mask, dist,
# x_proj=..., x_pitch=..., x_azimuth=..., rgb=..., sample_idx=...)`).
# -----------------------------------------------------------------------------
FEAT_DIM = 128   # padded feature width (lane-aligned)
HIDDEN = 128
OUT_DIM = 128    # lane-dense output; only first 3 lanes are RGB


def make_lightfield_params(key):
    k1, k2, k3 = jax.random.split(key, 3)
    scale = 0.05
    W1 = (scale * jax.random.normal(k1, (FEAT_DIM, HIDDEN), jnp.float32)).astype(jnp.bfloat16)
    b1 = jnp.zeros((HIDDEN,), jnp.float32)
    W2 = (scale * jax.random.normal(k2, (HIDDEN, HIDDEN), jnp.float32)).astype(jnp.bfloat16)
    b2 = jnp.zeros((HIDDEN,), jnp.float32)
    W3 = (scale * jax.random.normal(k3, (HIDDEN, OUT_DIM), jnp.float32)).astype(jnp.bfloat16)
    b3 = jnp.zeros((OUT_DIM,), jnp.float32)
    return (W1, b1, W2, b2, W3, b3)


@jax.jit
def _lightfield_forward(params, x, ray_dirs, closest_mask, x_dist, x_proj,
                        x_pitch, x_azimuth, rgb):
    """Jitted: feature-slab build + Pallas MLP + RGB slice (one dispatch)."""
    S, N, K, _ = x.shape
    f0 = 3 * K + 3 + 4 * K + 1 + 3 * K
    assert f0 <= FEAT_DIM
    bf = jnp.bfloat16
    # Single bf16 materialization of the lane-aligned feature slab (incl. pad).
    feats = jnp.concatenate(
        [
            x.reshape(S, N, K * 3).astype(bf),
            ray_dirs.astype(bf),
            closest_mask.astype(bf),
            x_dist.astype(bf),
            x_pitch.astype(bf),
            x_azimuth.astype(bf),
            x_proj[..., None].astype(bf),
            rgb.reshape(S, N, K * 3).astype(bf),
            jnp.zeros((S, N, FEAT_DIM - f0), bf),
        ],
        axis=-1,
    )
    flat = feats.reshape(S * N, FEAT_DIM)
    out = lightfield_mlp_pallas(flat, params)          # (S*N, OUT_DIM) f32
    return out[:, :3].reshape(S, N, 3)                 # RGB per ray (one slice)


def lightfield_model(params, x, ray_dirs, closest_mask, x_dist, *, x_proj,
                     x_pitch, x_azimuth, rgb, sample_idx, output_dict):
    color = _lightfield_forward(params, x, ray_dirs, closest_mask, x_dist,
                                x_proj, x_pitch, x_azimuth, rgb)
    return color, output_dict


# -----------------------------------------------------------------------------
# Minimal synthetic scene / ray bundle stand-ins.
# -----------------------------------------------------------------------------
class Frame:
    def __init__(self, scene_matrix):
        self.scene_matrix = scene_matrix  # np.ndarray (num_nodes, cols)


class Scene:
    def __init__(self, frames):
        self.frames = frames


class RayBundle:
    def __init__(self, origins, directions, lengths, xys):
        self.origins = origins
        self.directions = directions
        self.lengths = lengths
        self.xys = xys


# -----------------------------------------------------------------------------
# PointLightFieldComposition (JAX/Pallas version).
# -----------------------------------------------------------------------------
class PointLightFieldComposition:
    def __init__(self, static_models):
        # static_models: {node_idx: lightfield params}
        self._models = {}
        self._static_models = dict(static_models)

    @staticmethod
    def split_for_uneven_batch_sz(pt_cloud_select, closest_point_dist,
                                  closest_point_azimuth, closest_point_pitch,
                                  ray_dirs_select, closest_point_mask,
                                  sample_mask, n_batch_rays):
        for cf_id in list(closest_point_dist.keys()):
            v = closest_point_dist[cf_id]
            if v.shape[0] > n_batch_rays:
                factor = v.shape[0] // n_batch_rays
                for i in range(factor):
                    cf_id_new = cf_id + (i,)
                    sl = slice(i * n_batch_rays, (i + 1) * n_batch_rays)
                    pt_cloud_select[cf_id_new] = pt_cloud_select[cf_id]
                    closest_point_dist[cf_id_new] = closest_point_dist[cf_id][sl]
                    closest_point_azimuth[cf_id_new] = closest_point_azimuth[cf_id][sl]
                    closest_point_pitch[cf_id_new] = closest_point_pitch[cf_id][sl]
                    ray_dirs_select[cf_id_new] = ray_dirs_select[cf_id][sl]
                    closest_point_mask[cf_id_new] = closest_point_mask[cf_id][sl]
                    sample_mask[cf_id_new] = sample_mask[cf_id][:, sl]
                for d in (pt_cloud_select, closest_point_dist, closest_point_azimuth,
                          closest_point_pitch, ray_dirs_select, closest_point_mask,
                          sample_mask):
                    del d[cf_id]
        return (pt_cloud_select, closest_point_dist, closest_point_azimuth,
                closest_point_pitch, ray_dirs_select, closest_point_mask,
                sample_mask)

    def forward(self, ray_bundle, scene, closest_point_mask, pt_cloud_select,
                closest_point_dist, closest_point_azimuth, closest_point_pitch,
                output_dict, ray_dirs_select, rotate2cam=False):
        # lengths/directions/origins are already "detached" (no autograd in JAX fwd).
        xycfn = ray_bundle.xys
        c = jnp.zeros_like(ray_bundle.origins)
        n_batch_rays = min(v.shape[0] for v in closest_point_dist.values())
        n_xy = xycfn.shape[-2]
        # NOTE: faithful to the original module, the batch index stored in
        # sample_mask is the dict-enumeration index `j`, not cf_id[0].
        sample_mask = {
            cf_id: jnp.stack([
                jnp.ones((n_xy,), dtype=jnp.int32) * j,
                jnp.linspace(0, n_xy - 1, n_xy).astype(jnp.int32),
            ])
            for j, cf_id in enumerate(list(closest_point_dist.keys()))
        }

        (pt_cloud_select, closest_point_dist, closest_point_azimuth,
         closest_point_pitch, ray_dirs_select, closest_point_mask,
         sample_mask) = self.split_for_uneven_batch_sz(
            pt_cloud_select, closest_point_dist, closest_point_azimuth,
            closest_point_pitch, ray_dirs_select, closest_point_mask,
            sample_mask, n_batch_rays)

        for node_idx, model_params in self._static_models.items():
            # Collect per-cf_id tensors in Python lists, one jnp.stack per
            # tensor at the end (no O(n^2) incremental concatenates).
            xs, dists, azimuths, pitches = [], [], [], []
            ray_dirss, masks, rgbs, projs = [], [], [], []
            for cf_id, mask in closest_point_mask.items():
                frame = scene.frames[int(cf_id[1])]
                if np.any(node_idx == frame.scene_matrix[:, 0]):
                    closest_rgb_fr = jnp.zeros_like(pt_cloud_select[cf_id])
                    # TODO(synk): rotate2cam branch needs lidar/camera edge
                    # transforms from the full NeuralScene graph; not modeled here.
                    if mask is not None:
                        xs.append(pt_cloud_select[cf_id])
                        dists.append(closest_point_dist[cf_id])
                        azimuths.append(closest_point_azimuth[cf_id])
                        pitches.append(closest_point_pitch[cf_id])
                        ray_dirss.append(ray_dirs_select[cf_id])
                        masks.append(closest_point_mask[cf_id])
                        rgbs.append(closest_rgb_fr)
                        projs.append(ray_bundle.lengths[tuple(sample_mask[cf_id])])
            sample_idx = list(closest_point_mask.keys())
            if xs:
                x = jnp.stack(xs)
                x_dist = jnp.stack(dists)
                azimuth = jnp.stack(azimuths)
                pitch = jnp.stack(pitches)
                ray_dirs = jnp.stack(ray_dirss)
                closest_mask = jnp.stack(masks)
                closest_rgb = jnp.stack(rgbs)
                projected_dist = jnp.stack(projs)

                color, output_dict = lightfield_model(
                    model_params, x, ray_dirs, closest_mask, x_dist,
                    x_proj=projected_dist, x_pitch=pitch, x_azimuth=azimuth,
                    rgb=closest_rgb, sample_idx=sample_idx,
                    output_dict=output_dict)

                # Batched scatter: one .at[].set instead of a per-cf_id loop.
                # Faithful to the original zip(color, sample_mask.values()).
                mask_list = list(sample_mask.values())
                n_scatter = min(color.shape[0], len(mask_list))
                if n_scatter > 0:
                    all_masks = jnp.stack(mask_list[:n_scatter])      # (n, 2, N)
                    rows_idx = all_masks[:, 0, :].reshape(-1)
                    cols_idx = all_masks[:, 1, :].reshape(-1)
                    vals = color[:n_scatter].reshape(-1, 3)
                    c = c.at[rows_idx, cols_idx].set(vals)
        return c, output_dict


# -----------------------------------------------------------------------------
# Example run.
# -----------------------------------------------------------------------------
if __name__ == "__main__":
    key = jax.random.PRNGKey(0)
    B = 2       # number of (camera, frame) ids == ray-bundle batch
    N = 64      # rays per cf_id
    K = 8       # closest points per ray

    keys = jax.random.split(key, 16)
    origins = jax.random.normal(keys[0], (B, N, 3), jnp.float32)
    directions = jax.random.normal(keys[1], (B, N, 3), jnp.float32)
    lengths = jnp.abs(jax.random.normal(keys[2], (B, N), jnp.float32)) + 1.0
    xys = jax.random.normal(keys[3], (B, N, 2), jnp.float32)
    ray_bundle = RayBundle(origins, directions, lengths, xys)

    cf_ids = [(0, 0), (1, 0)]   # (camera_idx, frame_idx)
    pt_cloud_select = {}
    closest_point_dist = {}
    closest_point_azimuth = {}
    closest_point_pitch = {}
    ray_dirs_select = {}
    closest_point_mask = {}
    for j, cf_id in enumerate(cf_ids):
        kk = jax.random.split(keys[4 + j], 6)
        pt_cloud_select[cf_id] = jax.random.normal(kk[0], (N, K, 3), jnp.float32)
        closest_point_dist[cf_id] = jnp.abs(jax.random.normal(kk[1], (N, K), jnp.float32))
        closest_point_azimuth[cf_id] = jax.random.uniform(kk[2], (N, K), jnp.float32, -np.pi, np.pi)
        closest_point_pitch[cf_id] = jax.random.uniform(kk[3], (N, K), jnp.float32, -np.pi / 2, np.pi / 2)
        ray_dirs_select[cf_id] = jax.random.normal(kk[4], (N, 3), jnp.float32)
        closest_point_mask[cf_id] = (jax.random.uniform(kk[5], (N, K)) > 0.3).astype(jnp.float32)

    # One static node (node_idx 0) present in frame 0's scene_matrix.
    scene = Scene(frames=[Frame(np.array([[0, 1], [3, 1]], dtype=np.int64))])
    static_models = {0: make_lightfield_params(keys[10])}

    composer = PointLightFieldComposition(static_models)
    c, output_dict = composer.forward(
        ray_bundle, scene, closest_point_mask, pt_cloud_select,
        closest_point_dist, closest_point_azimuth, closest_point_pitch,
        output_dict={}, ray_dirs_select=ray_dirs_select, rotate2cam=False)

    c = jax.block_until_ready(c)
    assert c.shape == (B, N, 3)
    assert bool(jnp.all(jnp.isfinite(c)))
    print("KERNEL_OK")
</pallas_src>

<mosaic_0001>
module attributes {stable_mosaic.version = 11 : i64} {
  func.func @_lightfield_mlp_kernel(%arg0: i32, %arg1: memref<64x128xbf16, #tpu.memory_space<vmem>>, %arg2: memref<128x128xbf16, #tpu.memory_space<vmem>>, %arg3: memref<1x128xf32, #tpu.memory_space<vmem>>, %arg4: memref<128x128xbf16, #tpu.memory_space<vmem>>, %arg5: memref<1x128xf32, #tpu.memory_space<vmem>>, %arg6: memref<128x128xbf16, #tpu.memory_space<vmem>>, %arg7: memref<1x128xf32, #tpu.memory_space<vmem>>, %arg8: memref<64x128xf32, #tpu.memory_space<vmem>>) attributes {dimension_semantics = [#tpu.dimension_semantics<parallel>], iteration_bounds = array<i64: 2>, scalar_prefetch = 0 : i64, scratch_operands = 0 : i64, tpu.core_type = #tpu.core_type<tc>, window_params = [{transform_indices = @transform_0, window_bounds = array<i64: 64, 128>}, {pipeline_mode = #tpu.pipeline_mode<synchronous>, transform_indices = @transform_1, window_bounds = array<i64: 128, 128>}, {pipeline_mode = #tpu.pipeline_mode<synchronous>, transform_indices = @transform_2, window_bounds = array<i64: 1, 128>}, {pipeline_mode = #tpu.pipeline_mode<synchronous>, transform_indices = @transform_3, window_bounds = array<i64: 128, 128>}, {pipeline_mode = #tpu.pipeline_mode<synchronous>, transform_indices = @transform_4, window_bounds = array<i64: 1, 128>}, {pipeline_mode = #tpu.pipeline_mode<synchronous>, transform_indices = @transform_5, window_bounds = array<i64: 128, 128>}, {pipeline_mode = #tpu.pipeline_mode<synchronous>, transform_indices = @transform_6, window_bounds = array<i64: 1, 128>}, {transform_indices = @transform_7, window_bounds = array<i64: 64, 128>}]} {
    %c0 = arith.constant 0 : index
    %c0_0 = arith.constant 0 : index
    %0 = vector.load %arg1[%c0, %c0_0] : memref<64x128xbf16, #tpu.memory_space<vmem>>, vector<64x128xbf16>
    %c0_1 = arith.constant 0 : index
    %c0_2 = arith.constant 0 : index
    %1 = vector.load %arg2[%c0_1, %c0_2] : memref<128x128xbf16, #tpu.memory_space<vmem>>, vector<128x128xbf16>
    %cst = arith.constant dense<0.000000e+00> : vector<64x128xf32>
    %2 = tpu.matmul %0, %1, %cst {dimension_numbers = #tpu.dot_dimension_numbers<[1], [0], [0], [1], [0, 0, 1, 1], [], []>} : vector<64x128xbf16>, vector<128x128xbf16>, vector<64x128xf32> -> vector<64x128xf32>
    %c0_3 = arith.constant 0 : index
    %c0_4 = arith.constant 0 : index
    %3 = vector.load %arg3[%c0_3, %c0_4] : memref<1x128xf32, #tpu.memory_space<vmem>>, vector<1x128xf32>
    %4 = vector.broadcast %3 : vector<1x128xf32> to vector<64x128xf32>
    %5 = arith.addf %2, %4 : vector<64x128xf32>
    %cst_5 = arith.constant 0.000000e+00 : f32
    %6 = vector.broadcast %cst_5 : f32 to vector<64x128xf32>
    %7 = arith.maximumf %5, %6 : vector<64x128xf32>
    %8 = arith.truncf %7 : vector<64x128xf32> to vector<64x128xbf16>
    %c0_6 = arith.constant 0 : index
    %c0_7 = arith.constant 0 : index
    %9 = vector.load %arg4[%c0_6, %c0_7] : memref<128x128xbf16, #tpu.memory_space<vmem>>, vector<128x128xbf16>
    %cst_8 = arith.constant dense<0.000000e+00> : vector<64x128xf32>
    %10 = tpu.matmul %8, %9, %cst_8 {dimension_numbers = #tpu.dot_dimension_numbers<[1], [0], [0], [1], [0, 0, 1, 1], [], []>} : vector<64x128xbf16>, vector<128x128xbf16>, vector<64x128xf32> -> vector<64x128xf32>
    %c0_9 = arith.constant 0 : index
    %c0_10 = arith.constant 0 : index
    %11 = vector.load %arg5[%c0_9, %c0_10] : memref<1x128xf32, #tpu.memory_space<vmem>>, vector<1x128xf32>
    %12 = vector.broadcast %11 : vector<1x128xf32> to vector<64x128xf32>
    %13 = arith.addf %10, %12 : vector<64x128xf32>
    %cst_11 = arith.constant 0.000000e+00 : f32
    %14 = vector.broadcast %cst_11 : f32 to vector<64x128xf32>
    %15 = arith.maximumf %13, %14 : vector<64x128xf32>
    %16 = arith.truncf %15 : vector<64x128xf32> to vector<64x128xbf16>
    %c0_12 = arith.constant 0 : index
    %c0_13 = arith.constant 0 : index
    %17 = vector.load %arg6[%c0_12, %c0_13] : memref<128x128xbf16, #tpu.memory_space<vmem>>, vector<128x128xbf16>
    %cst_14 = arith.constant dense<0.000000e+00> : vector<64x128xf32>
    %18 = tpu.matmul %16, %17, %cst_14 {dimension_numbers = #tpu.dot_dimension_numbers<[1], [0], [0], [1], [0, 0, 1, 1], [], []>} : vector<64x128xbf16>, vector<128x128xbf16>, vector<64x128xf32> -> vector<64x128xf32>
    %c0_15 = arith.constant 0 : index
    %c0_16 = arith.constant 0 : index
    %19 = vector.load %arg7[%c0_15, %c0_16] : memref<1x128xf32, #tpu.memory_space<vmem>>, vector<1x128xf32>
    %20 = vector.broadcast %19 : vector<1x128xf32> to vector<64x128xf32>
    %21 = arith.addf %18, %20 : vector<64x128xf32>
    %22 = arith.negf %21 : vector<64x128xf32>
    %23 = math.exp %22 : vector<64x128xf32>
    %cst_17 = arith.constant 1.000000e+00 : f32
    %24 = vector.broadcast %cst_17 : f32 to vector<64x128xf32>
    %25 = arith.addf %24, %23 : vector<64x128xf32>
    %26 = arith.divf %24, %25 : vector<64x128xf32>
    %c0_18 = arith.constant 0 : index
    %c0_19 = arith.constant 0 : index
    %27 = vector.load %arg8[%c0_18, %c0_19] : memref<64x128xf32, #tpu.memory_space<vmem>>, vector<64x128xf32>
    tpu.vector_store %arg8[%c0_18, %c0_19], %26 {strides = array<i32>} : memref<64x128xf32, #tpu.memory_space<vmem>>, vector<64x128xf32>,
    return
  }
  func.func @transform_0(%arg0: i32) -> (i32, i32) {
    %c0_i32 = arith.constant 0 : i32
    %c0_i32_0 = arith.constant 0 : i32
    return %arg0, %c0_i32 : i32, i32
  }
  func.func @transform_1(%arg0: i32) -> (i32, i32) {
    %c0_i32 = arith.constant 0 : i32
    %c0_i32_0 = arith.constant 0 : i32
    %c0_i32_1 = arith.constant 0 : i32
    return %c0_i32, %c0_i32_0 : i32, i32
  }
  func.func @transform_2(%arg0: i32) -> (i32, i32) {
    %c0_i32 = arith.constant 0 : i32
    %c0_i32_0 = arith.constant 0 : i32
    %c0_i32_1 = arith.constant 0 : i32
    return %c0_i32, %c0_i32_0 : i32, i32
  }
  func.func @transform_3(%arg0: i32) -> (i32, i32) {
    %c0_i32 = arith.constant 0 : i32
    %c0_i32_0 = arith.constant 0 : i32
    %c0_i32_1 = arith.constant 0 : i32
    return %c0_i32, %c0_i32_0 : i32, i32
  }
  func.func @transform_4(%arg0: i32) -> (i32, i32) {
    %c0_i32 = arith.constant 0 : i32
    %c0_i32_0 = arith.constant 0 : i32
    %c0_i32_1 = arith.constant 0 : i32
    return %c0_i32, %c0_i32_0 : i32, i32
  }
  func.func @transform_5(%arg0: i32) -> (i32, i32) {
    %c0_i32 = arith.constant 0 : i32
    %c0_i32_0 = arith.constant 0 : i32
    %c0_i32_1 = arith.constant 0 : i32
    return %c0_i32, %c0_i32_0 : i32, i32
  }
  func.func @transform_6(%arg0: i32) -> (i32, i32) {
    %c0_i32 = arith.constant 0 : i32
    %c0_i32_0 = arith.constant 0 : i32
    %c0_i32_1 = arith.constant 0 : i32
    return %c0_i32, %c0_i32_0 : i32, i32
  }
  func.func @transform_7(%arg0: i32) -> (i32, i32) {
    %c0_i32 = arith.constant 0 : i32
    %c0_i32_0 = arith.constant 0 : i32
    return %arg0, %c0_i32 : i32, i32
  }
}

</mosaic_0001>

<llo_original>
// kernel: _lightfield_forward.1
$region0: #{_lightfield_forward.1}
  #allocation0 [shape = 'u32[]', space=smem, size = 0x4, offset = 0x4, fixed_abs, tag = 'smem constant byte address 0x4 - core index']
  #allocation1 [shape = 'u32[144,128]{1,0:T(1,128)}', space=vmem, size = 0x12000, scoped, tag = 'internal scratch']
  %s0 = inlined_call_operand.vmem [shape: bf16[128,128], index: 0, kind: input, shape index: {}]
  %s1 = inlined_call_operand.vmem [shape: bf16[128,128], index: 1, kind: input, shape index: {}]
  %s2 = inlined_call_operand.vmem [shape: f32[1,128], index: 2, kind: input, shape index: {}]
  %s3 = inlined_call_operand.vmem [shape: bf16[128,128], index: 3, kind: input, shape index: {}]
  %s4 = inlined_call_operand.vmem [shape: f32[1,128], index: 4, kind: input, shape index: {}]
  %s5 = inlined_call_operand.vmem [shape: bf16[128,128], index: 5, kind: input, shape index: {}]
  %s6 = inlined_call_operand.vmem [shape: f32[1,128], index: 6, kind: input, shape index: {}]
  %s7 = inlined_call_operand.vmem [shape: f32[128,128], index: 7, kind: output, shape index: {}]
  %s8 = sld [smem:[#allocation0]]
  $region61: #{_lightfield_forward.1} parent=0
    _
  %s10 = ssub.s32 1, %s8
  %s11 = scalar_select 0, %s10, %s8
  loop: start=0, step=1, limit=4
  $region2: #{_lightfield_forward.1} parent=0 // loop_pre_header
    _
  $region3: #{_lightfield_forward.1} parent=0 // loop_header
    %s13 = sphi 0, %s17
    %p14 = scmp.ge.s32.totalorder %s13, 4
    %s23 = sphi 0, %s25
    %s26 = sphi 0, %s23
    %s27 = sphi 0, %s26
    %s43 = sphi 0, %s27
    %s47 = sphi 0, %s47
    %s49 = sphi 0, %s47
    %s50 = sphi 0, %s49
    %s64 = sphi 0, %s50
    %s68 = sphi 0, %s68
    %s70 = sphi 0, %s68
    %s71 = sphi 0, %s70
    %s85 = sphi 0, %s71
    %s89 = sphi 0, %s89
    %s91 = sphi 0, %s89
    %s92 = sphi 0, %s91
    %s106 = sphi 0, %s92
    %s110 = sphi 0, %s110
    %s112 = sphi 0, %s110
    %s113 = sphi 0, %s112
    %s127 = sphi 0, %s113
    %s131 = sphi 0, %s131
    %s133 = sphi 0, %s131
    %s134 = sphi 0, %s133
    %s148 = sphi 0, %s134
    %s152 = sphi 0, %s152
    %s154 = sphi 0, %s152
    %s155 = sphi 0, %s154
    %s169 = sphi 0, %s155
    %s175 = sphi 0, %s177
    %s178 = sphi 0, %s175
    %s179 = sphi 0, %s178
    %s195 = sphi 0, %s179
  $region4: #{_lightfield_forward.1} parent=0 // loop_header_branch
    %16 = sbr.rel (%p14) target = $region8
  $region5: #{_lightfield_forward.1} parent=0 // loop_body
    %s18 = ssub.s32 %s13, 1
    %s19 = ssub.s32 %s13, 2
    %s20 = sadd.s32 %s13, 1
    %s21 = ssub.s32 %s13, %s20
    %p22 = scmp.eq.s32.totalorder %s21, 0
    %s24 = sadd.s32 %s23, 1
    %s25 = scalar_select %p22, %s23, %s24
    %p28 = pneg %p22
    %p29 = scmp.eq.s32.totalorder %s13, 1
    %p30 = por %p28, %p29
    %p31 = scmp.ne.s32.totalorder %s23, %s26
    %p32 = scmp.eq.s32.totalorder %s13, 0
    %p33 = por %p31, %p32
    %p34 = scmp.ne.s32.totalorder %s23, %s26
    %p35 = scmp.eq.s32.totalorder %s18, 1
    %p36 = por %p34, %p35
    %p37 = scmp.ne.s32.totalorder %s26, %s27
    %p38 = scmp.eq.s32.totalorder %s18, 0
    %p39 = por %p37, %p38
    %p40 = scmp.ne.s32.totalorder %s26, %s27
    %p41 = scmp.eq.s32.totalorder %s19, 1
    %p42 = por %p40, %p41
    %p44 = scmp.ne.s32.totalorder %s27, %s43
    %p45 = scmp.eq.s32.totalorder %s19, 0
    %p46 = por %p44, %p45
    %s48 = sadd.s32 %s47, 1
    %p51 = scmp.eq.s32.totalorder %s13, 1
    %p52 = scmp.ne.s32.totalorder %s47, %s49
    %p53 = scmp.eq.s32.totalorder %s13, 0
    %p54 = por %p52, %p53
    %p55 = scmp.ne.s32.totalorder %s47, %s49
    %p56 = scmp.eq.s32.totalorder %s18, 1
    %p57 = por %p55, %p56
    %p58 = scmp.ne.s32.totalorder %s49, %s50
    %p59 = scmp.eq.s32.totalorder %s18, 0
    %p60 = por %p58, %p59
    %p61 = scmp.ne.s32.totalorder %s49, %s50
    %p62 = scmp.eq.s32.totalorder %s19, 1
    %p63 = por %p61, %p62
    %p65 = scmp.ne.s32.totalorder %s50, %s64
    %p66 = scmp.eq.s32.totalorder %s19, 0
    %p67 = por %p65, %p66
    %s69 = sadd.s32 %s68, 1
    %p72 = scmp.eq.s32.totalorder %s13, 1
    %p73 = scmp.ne.s32.totalorder %s68, %s70
    %p74 = scmp.eq.s32.totalorder %s13, 0
    %p75 = por %p73, %p74
    %p76 = scmp.ne.s32.totalorder %s68, %s70
    %p77 = scmp.eq.s32.totalorder %s18, 1
    %p78 = por %p76, %p77
    %p79 = scmp.ne.s32.totalorder %s70, %s71
    %p80 = scmp.eq.s32.totalorder %s18, 0
    %p81 = por %p79, %p80
    %p82 = scmp.ne.s32.totalorder %s70, %s71
    %p83 = scmp.eq.s32.totalorder %s19, 1
    %p84 = por %p82, %p83
    %p86 = scmp.ne.s32.totalorder %s71, %s85
    %p87 = scmp.eq.s32.totalorder %s19, 0
    %p88 = por %p86, %p87
    %s90 = sadd.s32 %s89, 1
    %p93 = scmp.eq.s32.totalorder %s13, 1
    %p94 = scmp.ne.s32.totalorder %s89, %s91
    %p95 = scmp.eq.s32.totalorder %s13, 0
    %p96 = por %p94, %p95
    %p97 = scmp.ne.s32.totalorder %s89, %s91
    %p98 = scmp.eq.s32.totalorder %s18, 1
    %p99 = por %p97, %p98
    %p100 = scmp.ne.s32.totalorder %s91, %s92
    %p101 = scmp.eq.s32.totalorder %s18, 0
    %p102 = por %p100, %p101
    %p103 = scmp.ne.s32.totalorder %s91, %s92
    %p104 = scmp.eq.s32.totalorder %s19, 1
    %p105 = por %p103, %p104
    %p107 = scmp.ne.s32.totalorder %s92, %s106
    %p108 = scmp.eq.s32.totalorder %s19, 0
    %p109 = por %p107, %p108
    %s111 = sadd.s32 %s110, 1
    %p114 = scmp.eq.s32.totalorder %s13, 1
    %p115 = scmp.ne.s32.totalorder %s110, %s112
    %p116 = scmp.eq.s32.totalorder %s13, 0
    %p117 = por %p115, %p116
    %p118 = scmp.ne.s32.totalorder %s110, %s112
    %p119 = scmp.eq.s32.totalorder %s18, 1
    %p120 = por %p118, %p119
    %p121 = scmp.ne.s32.totalorder %s112, %s113
    %p122 = scmp.eq.s32.totalorder %s18, 0
    %p123 = por %p121, %p122
    %p124 = scmp.ne.s32.totalorder %s112, %s113
    %p125 = scmp.eq.s32.totalorder %s19, 1
    %p126 = por %p124, %p125
    %p128 = scmp.ne.s32.totalorder %s113, %s127
    %p129 = scmp.eq.s32.totalorder %s19, 0
    %p130 = por %p128, %p129
    %s132 = sadd.s32 %s131, 1
    %p135 = scmp.eq.s32.totalorder %s13, 1
    %p136 = scmp.ne.s32.totalorder %s131, %s133
    %p137 = scmp.eq.s32.totalorder %s13, 0
    %p138 = por %p136, %p137
    %p139 = scmp.ne.s32.totalorder %s131, %s133
    %p140 = scmp.eq.s32.totalorder %s18, 1
    %p141 = por %p139, %p140
    %p142 = scmp.ne.s32.totalorder %s133, %s134
    %p143 = scmp.eq.s32.totalorder %s18, 0
    %p144 = por %p142, %p143
    %p145 = scmp.ne.s32.totalorder %s133, %s134
    %p146 = scmp.eq.s32.totalorder %s19, 1
    %p147 = por %p145, %p146
    %p149 = scmp.ne.s32.totalorder %s134, %s148
    %p150 = scmp.eq.s32.totalorder %s19, 0
    %p151 = por %p149, %p150
    %s153 = sadd.s32 %s152, 1
    %p156 = scmp.eq.s32.totalorder %s13, 1
    %p157 = scmp.ne.s32.totalorder %s152, %s154
    %p158 = scmp.eq.s32.totalorder %s13, 0
    %p159 = por %p157, %p158
    %p160 = scmp.ne.s32.totalorder %s152, %s154
    %p161 = scmp.eq.s32.totalorder %s18, 1
    %p162 = por %p160, %p161
    %p163 = scmp.ne.s32.totalorder %s154, %s155
    %p164 = scmp.eq.s32.totalorder %s18, 0
    %p165 = por %p163, %p164
    %p166 = scmp.ne.s32.totalorder %s154, %s155
    %p167 = scmp.eq.s32.totalorder %s19, 1
    %p168 = por %p166, %p167
    %p170 = scmp.ne.s32.totalorder %s155, %s169
    %p171 = scmp.eq.s32.totalorder %s19, 0
    %p172 = por %p170, %p171
    %s173 = ssub.s32 %s13, %s20
    %p174 = scmp.eq.s32.totalorder %s173, 0
    %s176 = sadd.s32 %s175, 1
    %s177 = scalar_select %p174, %s175, %s176
    %p180 = pneg %p174
    %p181 = scmp.eq.s32.totalorder %s13, 1
    %p182 = por %p180, %p181
    %p183 = scmp.ne.s32.totalorder %s175, %s178
    %p184 = scmp.eq.s32.totalorder %s13, 0
    %p185 = por %p183, %p184
    %p186 = scmp.ne.s32.totalorder %s175, %s178
    %p187 = scmp.eq.s32.totalorder %s18, 1
    %p188 = por %p186, %p187
    %p189 = scmp.ne.s32.totalorder %s178, %s179
    %p190 = scmp.eq.s32.totalorder %s18, 0
    %p191 = por %p189, %p190
    %p192 = scmp.ne.s32.totalorder %s178, %s179
    %p193 = scmp.eq.s32.totalorder %s19, 1
    %p194 = por %p192, %p193
    %p196 = scmp.ne.s32.totalorder %s179, %s195
    %p197 = scmp.eq.s32.totalorder %s19, 0
    %p198 = por %p196, %p197
    %p199 = scmp.le.s32.totalorder 1, %s13
    %p200 = scmp.lt.s32.totalorder %s13, 3
    %p201 = pnand %p199, %p200
    %p202 = pneg %p201
    // Predicated region
    $region9: #{_lightfield_forward.1} parent=5 // pred_check
      _
    $region10: #{_lightfield_forward.1} parent=5 // pred_check_branch
      %204 = sbr.rel (%p201) target = $region12
    $region11: #{_lightfield_forward.1} parent=5 // pred_region
      %s205 = ssub.s32 %s13, 1
      // Predicated region
      $region13: #{_lightfield_forward.1} parent=11 // pred_check
        %p206 = pneg %p60
      $region14: #{_lightfield_forward.1} parent=11 // pred_check_branch
        %208 = sbr.rel (%p206) target = $region16
      $region15: #{_lightfield_forward.1} parent=11 // pred_region
        _
      $region16: #{_lightfield_forward.1} parent=11 // pred_fallthru
        _
      // Predicated region
      $region17: #{_lightfield_forward.1} parent=11 // pred_check
        %p209 = pneg %p81
      $region18: #{_lightfield_forward.1} parent=11 // pred_check_branch
        %211 = sbr.rel (%p209) target = $region20
      $region19: #{_lightfield_forward.1} parent=11 // pred_region
        _
      $region20: #{_lightfield_forward.1} parent=11 // pred_fallthru
        _
      // Predicated region
      $region21: #{_lightfield_forward.1} parent=11 // pred_check
        %p212 = pneg %p102
      $region22: #{_lightfield_forward.1} parent=11 // pred_check_branch
        %214 = sbr.rel (%p212) target = $region24
      $region23: #{_lightfield_forward.1} parent=11 // pred_region
        _
      $region24: #{_lightfield_forward.1} parent=11 // pred_fallthru
        _
      // Predicated region
      $region25: #{_lightfield_forward.1} parent=11 // pred_check
        %p215 = pneg %p123
      $region26: #{_lightfield_forward.1} parent=11 // pred_check_branch
        %217 = sbr.rel (%p215) target = $region28
      $region27: #{_lightfield_forward.1} parent=11 // pred_region
        _
      $region28: #{_lightfield_forward.1} parent=11 // pred_fallthru
        _
      // Predicated region
      $region29: #{_lightfield_forward.1} parent=11 // pred_check
        %p218 = pneg %p144
      $region30: #{_lightfield_forward.1} parent=11 // pred_check_branch
        %220 = sbr.rel (%p218) target = $region32
      $region31: #{_lightfield_forward.1} parent=11 // pred_region
        _
      $region32: #{_lightfield_forward.1} parent=11 // pred_fallthru
        _
      // Predicated region
      $region33: #{_lightfield_forward.1} parent=11 // pred_check
        %p221 = pneg %p165
      $region34: #{_lightfield_forward.1} parent=11 // pred_check_branch
        %223 = sbr.rel (%p221) target = $region36
      $region35: #{_lightfield_forward.1} parent=11 // pred_region
        _
      $region36: #{_lightfield_forward.1} parent=11 // pred_fallthru
        _
    $region12: #{_lightfield_forward.1} parent=5 // pred_fallthru
      _
    %p224 = scmp.lt.s32.totalorder %s13, 2
    // Predicated region
    $region37: #{_lightfield_forward.1} parent=5 // pred_check
      %p225 = pneg %p224
    $region38: #{_lightfield_forward.1} parent=5 // pred_check_branch
      %227 = sbr.rel (%p225) target = $region40
    $region39: #{_lightfield_forward.1} parent=5 // pred_region
      // Predicated region
      $region41: #{_lightfield_forward.1} parent=39 // pred_check
        %p228 = pneg %p33
      $region42: #{_lightfield_forward.1} parent=39 // pred_check_branch
        %230 = sbr.rel (%p228) target = $region44
      $region43: #{_lightfield_forward.1} parent=39 // pred_region
        %s231 = smul.u32 8, %s13
        %p232 = scmp.lt.s32.totalorder %s231, 15
        %s233 = scalar_select %p232, %s231, 15
        %s234 = smul.addr %s233, 4
        %s235 = scalar_lea.vmem %s0, %s234
        %s236 = smul.u32 8, %s13
      $region44: #{_lightfield_forward.1} parent=39 // pred_fallthru
        _
    $region40: #{_lightfield_forward.1} parent=5 // pred_fallthru
      _
    %p237 = scmp.le.s32.totalorder 1, %s13
    %p238 = scmp.lt.s32.totalorder %s13, 3
    %p239 = pnand %p237, %p238
    %p240 = pneg %p239
    // Predicated region
    $region45: #{_lightfield_forward.1} parent=5 // pred_check
      _
    $region46: #{_lightfield_forward.1} parent=5 // pred_check_branch
      %242 = sbr.rel (%p239) target = $region48
    $region47: #{_lightfield_forward.1} parent=5 // pred_region
      %s243 = ssub.s32 %s13, 1
      %s244 = smul.u32 8, %s18
      %p245 = scmp.lt.s32.totalorder %s244, 15
      %s246 = scalar_select %p245, %s244, 15
      %s247 = smul.addr %s246, 4
      %s248 = scalar_lea.vmem %s0, %s247
      %p249 = pneg %p39
      %p250 = pneg %p36
      %p251 = pneg %p60
      %p252 = pneg %p57
      %p253 = pneg %p81
      %p254 = pneg %p78
      %p255 = pneg %p102
      %p256 = pneg %p99
      %p257 = pneg %p123
      %p258 = pneg %p120
      %p259 = pneg %p144
      %p260 = pneg %p141
      %p261 = pneg %p165
      %p262 = pneg %p162
      %p263 = pneg %p191
      %p264 = pneg %p188
      %s265 = smul.u32 8, %s18
      %p266 = scmp.lt.s32.totalorder %s265, 15
      %s267 = scalar_select %p266, %s265, 15
      %s268 = smul.addr %s267, 8
      %s269 = scalar_lea.vmem %s7, %s268
      %s270 = smul.u32 8, %s18
      %p271 = scmp.lt.s32.totalorder %s270, 15
      %s272 = scalar_select %p271, %s270, 15
      %s273 = smul.addr %s272, 4
      %s274 = scalar_lea.vmem %s0, %s273
      %s275 = smul.u32 8, %s18
      %s276 = smul.u32 8, %s18
      %p277 = scmp.lt.s32.totalorder %s276, 15
      %s278 = scalar_select %p277, %s276, 15
      %s279 = smul.addr %s278, 8
      %s280 = scalar_lea.vmem %s7, %s279
      %s281 = smul.u32 8, %s18
      %v283 = vld [vmem:[%s274] sm:$0xf]
      %v284 = vld [vmem:[%s274 + $0x4] sm:$0xf]
      %v285 = vld [vmem:[%s274 + $0x8] sm:$0xf]
      %v286 = vld [vmem:[%s274 + $0xc] sm:$0xf]
      %v287 = vld [vmem:[%s274 + $0x10] sm:$0xf]
      %v288 = vld [vmem:[%s274 + $0x14] sm:$0xf]
      %v289 = vld [vmem:[%s274 + $0x18] sm:$0xf]
      %v290 = vld [vmem:[%s274 + $0x1c] sm:$0xf]
      %v291 = vld [vmem:[%s1] sm:$0xf]
      %v292 = vld [vmem:[%s1 + $0x4] sm:$0xf]
      %v293 = vld [vmem:[%s1 + $0x8] sm:$0xf]
      %v294 = vld [vmem:[%s1 + $0xc] sm:$0xf]
      %v295 = vld [vmem:[%s1 + $0x10] sm:$0xf]
      %v296 = vld [vmem:[%s1 + $0x14] sm:$0xf]
      %v297 = vld [vmem:[%s1 + $0x18] sm:$0xf]
      %v298 = vld [vmem:[%s1 + $0x1c] sm:$0xf]
      %v299 = vld [vmem:[%s1 + $0x20] sm:$0xf]
      %v300 = vld [vmem:[%s1 + $0x24] sm:$0xf]
      %v301 = vld [vmem:[%s1 + $0x28] sm:$0xf]
      %v302 = vld [vmem:[%s1 + $0x2c] sm:$0xf]
      %v303 = vld [vmem:[%s1 + $0x30] sm:$0xf]
      %v304 = vld [vmem:[%s1 + $0x34] sm:$0xf]
      %v305 = vld [vmem:[%s1 + $0x38] sm:$0xf]
      %v306 = vld [vmem:[%s1 + $0x3c] sm:$0xf]
      %v307 = vld [vmem:[%s2] sm:$0x1]
      %v309 = vlaneseq
      %v310 = vshrl.u32 %v309, 7
      %v311 = vsub.s32 0, %v310
      %v312 = vrot.slane %v307, %v311
      %v322 = vunpack.c.l.b16 %v283
      %v323 = vunpack.c.l.b16 %v284
      %v324 = vunpack.c.l.b16 %v285
      %v325 = vunpack.c.l.b16 %v286
      %v326 = vunpack.c.l.b16 %v287
      %v327 = vunpack.c.l.b16 %v288
      %v328 = vunpack.c.l.b16 %v289
      %v329 = vunpack.c.l.b16 %v290
      %v330 = vpack.c.b16 %v323, %v322
      %v331 = vpack.c.b16 %v325, %v324
      %v332 = vpack.c.b16 %v327, %v326
      %v333 = vpack.c.b16 %v329, %v328
      %v354 = vunpack.c.l.b16 %v291
      %v355 = vunpack.c.l.b16 %v292
      %v356 = vunpack.c.l.b16 %v293
      %v357 = vunpack.c.l.b16 %v294
      %v358 = vunpack.c.l.b16 %v295
      %v359 = vunpack.c.l.b16 %v296
      %v360 = vunpack.c.l.b16 %v297
      %v361 = vunpack.c.l.b16 %v298
      %v362 = vunpack.c.l.b16 %v299
      %v363 = vunpack.c.l.b16 %v300
      %v364 = vunpack.c.l.b16 %v301
      %v365 = vunpack.c.l.b16 %v302
      %v366 = vunpack.c.l.b16 %v303
      %v367 = vunpack.c.l.b16 %v304
      %v368 = vunpack.c.l.b16 %v305
      %v369 = vunpack.c.l.b16 %v306
      %v370 = vpack.c.b16 %v355, %v354
      %v371 = vpack.c.b16 %v357, %v356
      %v372 = vpack.c.b16 %v359, %v358
      %v373 = vpack.c.b16 %v361, %v360
      %v374 = vpack.c.b16 %v363, %v362
      %v375 = vpack.c.b16 %v365, %v364
      %v376 = vpack.c.b16 %v367, %v366
      %v377 = vpack.c.b16 %v369, %v368
      %386 = vmatprep.subr.bf16.mxu0 0
      %387 = vmatpush1.bf16.msra.mxu0 %v370
      %388 = vmatprep.subr.bf16.mxu0 0
      %389 = vmatpush1.bf16.msra.mxu0 %v371
      %390 = vmatprep.subr.bf16.mxu0 0
      %391 = vmatpush1.bf16.msra.mxu0 %v372
      %392 = vmatprep.subr.bf16.mxu0 0
      %393 = vmatpush1.bf16.msra.mxu0 %v373
      %394 = vmatprep.subr.bf16.mxu0 0
      %395 = vmatpush1.bf16.msra.mxu0 %v374
      %396 = vmatprep.subr.bf16.mxu0 0
      %397 = vmatpush1.bf16.msra.mxu0 %v375
      %398 = vmatprep.subr.bf16.mxu0 0
      %399 = vmatpush1.bf16.msra.mxu0 %v376
      %400 = vmatprep.subr.bf16.mxu0 0
      %401 = vmatpush1.bf16.msra.mxu0 %v377
      %402 = vmatprep.subr.bf16.mxu0 0
      %403 = vmatpush1.bf16.msra.mxu0 0
      %404 = vmatprep.subr.bf16.mxu0 0
      %405 = vmatpush1.bf16.msra.mxu0 0
      %406 = vmatprep.subr.bf16.mxu0 0
      %407 = vmatpush1.bf16.msra.mxu0 0
      %408 = vmatprep.subr.bf16.mxu0 0
      %409 = vmatpush1.bf16.msra.mxu0 0
      %410 = vmatprep.subr.bf16.mxu0 0
      %411 = vmatpush1.bf16.msra.mxu0 0
      %412 = vmatprep.subr.bf16.mxu0 0
      %413 = vmatpush1.bf16.msra.mxu0 0
      %414 = vmatprep.subr.bf16.mxu0 0
      %415 = vmatpush1.bf16.msra.mxu0 0
      %416 = vmatprep.subr.bf16.mxu0 0
      %417 = vmatpush1.bf16.msra.mxu0 0
      %418 = vmatprep.mubr.bf16.mxu0 0
      %419 = vmatmul.mubr.bf16.gmra.mrb[0].mxu0 %v330
      %v420 = vpop.f32.mrb[0].mxu0
      %v421 = vadd.f32 %v312, %v420
      %v422 = vpop.f32.mrb[0].mxu0
      %v423 = vpop.f32.mrb[0].mxu0
      %v424 = vadd.f32 %v312, %v423
      %v425 = vpop.f32.mrb[0].mxu0
      %426 = vmatprep.mubr.bf16.mxu0 0
      %427 = vmatmul.mubr.bf16.gmra.mrb[0].mxu0 %v331
      %v428 = vpop.f32.mrb[0].mxu0
      %v429 = vadd.f32 %v312, %v428
      %v430 = vpop.f32.mrb[0].mxu0
      %v431 = vpop.f32.mrb[0].mxu0
      %v432 = vadd.f32 %v312, %v431
      %v433 = vpop.f32.mrb[0].mxu0
      %434 = vmatprep.mubr.bf16.mxu0 0
      %435 = vmatmul.mubr.bf16.gmra.mrb[0].mxu0 %v332
      %v436 = vpop.f32.mrb[0].mxu0
      %v437 = vadd.f32 %v312, %v436
      %v438 = vpop.f32.mrb[0].mxu0
      %v439 = vpop.f32.mrb[0].mxu0
      %v440 = vadd.f32 %v312, %v439
      %v441 = vpop.f32.mrb[0].mxu0
      %442 = vmatprep.mubr.bf16.mxu0 0
      %443 = vmatmul.mubr.bf16.gmra.mrb[0].mxu0 %v333
      %v444 = vpop.f32.mrb[0].mxu0
      %v445 = vadd.f32 %v312, %v444
      %v446 = vpop.f32.mrb[0].mxu0
      %v447 = vpop.f32.mrb[0].mxu0
      %v448 = vadd.f32 %v312, %v447
      %v449 = vpop.f32.mrb[0].mxu0
      %450 = vdwg.mxu0
      %v451 = vmax.f32 %v421, 0.0
      %v452 = vmax.f32 %v424, 0.0
      %v453 = vmax.f32 %v429, 0.0
      %v454 = vmax.f32 %v432, 0.0
      %v455 = vmax.f32 %v437, 0.0
      %v456 = vmax.f32 %v440, 0.0
      %v457 = vmax.f32 %v445, 0.0
      %v458 = vmax.f32 %v448, 0.0
      %v459 = vpack.c.bf16 %v452, %v451
      %v460 = vpack.c.bf16 %v454, %v453
      %v461 = vpack.c.bf16 %v456, %v455
      %v462 = vpack.c.bf16 %v458, %v457
      %v463 = vld [vmem:[%s3] sm:$0xf]
      %v464 = vld [vmem:[%s3 + $0x4] sm:$0xf]
      %v465 = vld [vmem:[%s3 + $0x8] sm:$0xf]
      %v466 = vld [vmem:[%s3 + $0xc] sm:$0xf]
      %v467 = vld [vmem:[%s3 + $0x10] sm:$0xf]
      %v468 = vld [vmem:[%s3 + $0x14] sm:$0xf]
      %v469 = vld [vmem:[%s3 + $0x18] sm:$0xf]
      %v470 = vld [vmem:[%s3 + $0x1c] sm:$0xf]
      %v471 = vld [vmem:[%s3 + $0x20] sm:$0xf]
      %v472 = vld [vmem:[%s3 + $0x24] sm:$0xf]
      %v473 = vld [vmem:[%s3 + $0x28] sm:$0xf]
      %v474 = vld [vmem:[%s3 + $0x2c] sm:$0xf]
      %v475 = vld [vmem:[%s3 + $0x30] sm:$0xf]
      %v476 = vld [vmem:[%s3 + $0x34] sm:$0xf]
      %v477 = vld [vmem:[%s3 + $0x38] sm:$0xf]
      %v478 = vld [vmem:[%s3 + $0x3c] sm:$0xf]
      %v479 = vld [vmem:[%s4] sm:$0x1]
      %v481 = vlaneseq
      %v482 = vshrl.u32 %v481, 7
      %v483 = vsub.s32 0, %v482
      %v484 = vrot.slane %v479, %v483
      %v502 = vunpack.c.l.b16 %v463
      %v503 = vunpack.c.l.b16 %v464
      %v504 = vunpack.c.l.b16 %v465
      %v505 = vunpack.c.l.b16 %v466
      %v506 = vunpack.c.l.b16 %v467
      %v507 = vunpack.c.l.b16 %v468
      %v508 = vunpack.c.l.b16 %v469
      %v509 = vunpack.c.l.b16 %v470
      %v510 = vunpack.c.l.b16 %v471
      %v511 = vunpack.c.l.b16 %v472
      %v512 = vunpack.c.l.b16 %v473
      %v513 = vunpack.c.l.b16 %v474
      %v514 = vunpack.c.l.b16 %v475
      %v515 = vunpack.c.l.b16 %v476
      %v516 = vunpack.c.l.b16 %v477
      %v517 = vunpack.c.l.b16 %v478
      %v518 = vpack.c.b16 %v503, %v502
      %v519 = vpack.c.b16 %v505, %v504
      %v520 = vpack.c.b16 %v507, %v506
      %v521 = vpack.c.b16 %v509, %v508
      %v522 = vpack.c.b16 %v511, %v510
      %v523 = vpack.c.b16 %v513, %v512
      %v524 = vpack.c.b16 %v515, %v514
      %v525 = vpack.c.b16 %v517, %v516
      %534 = vmatprep.subr.bf16.mxu0 0
      %535 = vmatpush1.bf16.msra.mxu0 %v518
      %536 = vmatprep.subr.bf16.mxu0 0
      %537 = vmatpush1.bf16.msra.mxu0 %v519
      %538 = vmatprep.subr.bf16.mxu0 0
      %539 = vmatpush1.bf16.msra.mxu0 %v520
      %540 = vmatprep.subr.bf16.mxu0 0
      %541 = vmatpush1.bf16.msra.mxu0 %v521
      %542 = vmatprep.subr.bf16.mxu0 0
      %543 = vmatpush1.bf16.msra.mxu0 %v522
      %544 = vmatprep.subr.bf16.mxu0 0
      %545 = vmatpush1.bf16.msra.mxu0 %v523
      %546 = vmatprep.subr.bf16.mxu0 0
      %547 = vmatpush1.bf16.msra.mxu0 %v524
      %548 = vmatprep.subr.bf16.mxu0 0
      %549 = vmatpush1.bf16.msra.mxu0 %v525
      %550 = vmatprep.subr.bf16.mxu0 0
      %551 = vmatpush1.bf16.msra.mxu0 0
      %552 = vmatprep.subr.bf16.mxu0 0
      %553 = vmatpush1.bf16.msra.mxu0 0
      %554 = vmatprep.subr.bf16.mxu0 0
      %555 = vmatpush1.bf16.msra.mxu0 0
      %556 = vmatprep.subr.bf16.mxu0 0
      %557 = vmatpush1.bf16.msra.mxu0 0
      %558 = vmatprep.subr.bf16.mxu0 0
      %559 = vmatpush1.bf16.msra.mxu0 0
      %560 = vmatprep.subr.bf16.mxu0 0
      %561 = vmatpush1.bf16.msra.mxu0 0
      %562 = vmatprep.subr.bf16.mxu0 0
      %563 = vmatpush1.bf16.msra.mxu0 0
      %564 = vmatprep.subr.bf16.mxu0 0
      %565 = vmatpush1.bf16.msra.mxu0 0
      %566 = vmatprep.mubr.bf16.mxu0 0
      %567 = vmatmul.mubr.bf16.gmra.mrb[0].mxu0 %v459
      %v568 = vpop.f32.mrb[0].mxu0
      %v569 = vadd.f32 %v484, %v568
      %v570 = vpop.f32.mrb[0].mxu0
      %v571 = vpop.f32.mrb[0].mxu0
      %v572 = vadd.f32 %v484, %v571
      %v573 = vpop.f32.mrb[0].mxu0
      %574 = vmatprep.mubr.bf16.mxu0 0
      %575 = vmatmul.mubr.bf16.gmra.mrb[0].mxu0 %v460
      %v576 = vpop.f32.mrb[0].mxu0
      %v577 = vadd.f32 %v484, %v576
      %v578 = vpop.f32.mrb[0].mxu0
      %v579 = vpop.f32.mrb[0].mxu0
      %v580 = vadd.f32 %v484, %v579
      %v581 = vpop.f32.mrb[0].mxu0
      %582 = vmatprep.mubr.bf16.mxu0 0
      %583 = vmatmul.mubr.bf16.gmra.mrb[0].mxu0 %v461
      %v584 = vpop.f32.mrb[0].mxu0
      %v585 = vadd.f32 %v484, %v584
      %v586 = vpop.f32.mrb[0].mxu0
      %v587 = vpop.f32.mrb[0].mxu0
      %v588 = vadd.f32 %v484, %v587
      %v589 = vpop.f32.mrb[0].mxu0
      %590 = vmatprep.mubr.bf16.mxu0 0
      %591 = vmatmul.mubr.bf16.gmra.mrb[0].mxu0 %v462
      %v592 = vpop.f32.mrb[0].mxu0
      %v593 = vadd.f32 %v484, %v592
      %v594 = vpop.f32.mrb[0].mxu0
      %v595 = vpop.f32.mrb[0].mxu0
      %v596 = vadd.f32 %v484, %v595
      %v597 = vpop.f32.mrb[0].mxu0
      %598 = vdwg.mxu0
      %v599 = vmax.f32 %v569, 0.0
      %v600 = vmax.f32 %v572, 0.0
      %v601 = vmax.f32 %v577, 0.0
      %v602 = vmax.f32 %v580, 0.0
      %v603 = vmax.f32 %v585, 0.0
      %v604 = vmax.f32 %v588, 0.0
      %v605 = vmax.f32 %v593, 0.0
      %v606 = vmax.f32 %v596, 0.0
      %v607 = vpack.c.bf16 %v600, %v599
      %v608 = vpack.c.bf16 %v602, %v601
      %v609 = vpack.c.bf16 %v604, %v603
      %v610 = vpack.c.bf16 %v606, %v605
      %v611 = vld [vmem:[%s5] sm:$0xf]
      %v612 = vld [vmem:[%s5 + $0x4] sm:$0xf]
      %v613 = vld [vmem:[%s5 + $0x8] sm:$0xf]
      %v614 = vld [vmem:[%s5 + $0xc] sm:$0xf]
      %v615 = vld [vmem:[%s5 + $0x10] sm:$0xf]
      %v616 = vld [vmem:[%s5 + $0x14] sm:$0xf]
      %v617 = vld [vmem:[%s5 + $0x18] sm:$0xf]
      %v618 = vld [vmem:[%s5 + $0x1c] sm:$0xf]
      %v619 = vld [vmem:[%s5 + $0x20] sm:$0xf]
      %v620 = vld [vmem:[%s5 + $0x24] sm:$0xf]
      %v621 = vld [vmem:[%s5 + $0x28] sm:$0xf]
      %v622 = vld [vmem:[%s5 + $0x2c] sm:$0xf]
      %v623 = vld [vmem:[%s5 + $0x30] sm:$0xf]
      %v624 = vld [vmem:[%s5 + $0x34] sm:$0xf]
      %v625 = vld [vmem:[%s5 + $0x38] sm:$0xf]
      %v626 = vld [vmem:[%s5 + $0x3c] sm:$0xf]
      %v627 = vld [vmem:[%s6] sm:$0x1]
      %v629 = vlaneseq
      %v630 = vshrl.u32 %v629, 7
      %v631 = vsub.s32 0, %v630
      %v632 = vrot.slane %v627, %v631
      %v650 = vunpack.c.l.b16 %v611
      %v651 = vunpack.c.l.b16 %v612
      %v652 = vunpack.c.l.b16 %v613
      %v653 = vunpack.c.l.b16 %v614
      %v654 = vunpack.c.l.b16 %v615
      %v655 = vunpack.c.l.b16 %v616
      %v656 = vunpack.c.l.b16 %v617
      %v657 = vunpack.c.l.b16 %v618
      %v658 = vunpack.c.l.b16 %v619
      %v659 = vunpack.c.l.b16 %v620
      %v660 = vunpack.c.l.b16 %v621
      %v661 = vunpack.c.l.b16 %v622
      %v662 = vunpack.c.l.b16 %v623
      %v663 = vunpack.c.l.b16 %v624
      %v664 = vunpack.c.l.b16 %v625
      %v665 = vunpack.c.l.b16 %v626
      %v666 = vpack.c.b16 %v651, %v650
      %v667 = vpack.c.b16 %v653, %v652
      %v668 = vpack.c.b16 %v655, %v654
      %v669 = vpack.c.b16 %v657, %v656
      %v670 = vpack.c.b16 %v659, %v658
      %v671 = vpack.c.b16 %v661, %v660
      %v672 = vpack.c.b16 %v663, %v662
      %v673 = vpack.c.b16 %v665, %v664
      %682 = vmatprep.subr.bf16.mxu0 0
      %683 = vmatpush1.bf16.msra.mxu0 %v666
      %684 = vmatprep.subr.bf16.mxu0 0
      %685 = vmatpush1.bf16.msra.mxu0 %v667
      %686 = vmatprep.subr.bf16.mxu0 0
      %687 = vmatpush1.bf16.msra.mxu0 %v668
      %688 = vmatprep.subr.bf16.mxu0 0
      %689 = vmatpush1.bf16.msra.mxu0 %v669
      %690 = vmatprep.subr.bf16.mxu0 0
      %691 = vmatpush1.bf16.msra.mxu0 %v670
      %692 = vmatprep.subr.bf16.mxu0 0
      %693 = vmatpush1.bf16.msra.mxu0 %v671
      %694 = vmatprep.subr.bf16.mxu0 0
      %695 = vmatpush1.bf16.msra.mxu0 %v672
      %696 = vmatprep.subr.bf16.mxu0 0
      %697 = vmatpush1.bf16.msra.mxu0 %v673
      %698 = vmatprep.subr.bf16.mxu0 0
      %699 = vmatpush1.bf16.msra.mxu0 0
      %700 = vmatprep.subr.bf16.mxu0 0
      %701 = vmatpush1.bf16.msra.mxu0 0
      %702 = vmatprep.subr.bf16.mxu0 0
      %703 = vmatpush1.bf16.msra.mxu0 0
      %704 = vmatprep.subr.bf16.mxu0 0
      %705 = vmatpush1.bf16.msra.mxu0 0
      %706 = vmatprep.subr.bf16.mxu0 0
      %707 = vmatpush1.bf16.msra.mxu0 0
      %708 = vmatprep.subr.bf16.mxu0 0
      %709 = vmatpush1.bf16.msra.mxu0 0
      %710 = vmatprep.subr.bf16.mxu0 0
      %711 = vmatpush1.bf16.msra.mxu0 0
      %712 = vmatprep.subr.bf16.mxu0 0
      %713 = vmatpush1.bf16.msra.mxu0 0
      %714 = vmatprep.mubr.bf16.mxu0 0
      %715 = vmatmul.mubr.bf16.gmra.mrb[0].mxu0 %v607
      %v716 = vpop.f32.mrb[0].mxu0
      %v717 = vadd.f32 %v632, %v716
      %v718 = vpop.f32.mrb[0].mxu0
      %v719 = vpop.f32.mrb[0].mxu0
      %v720 = vadd.f32 %v632, %v719
      %v721 = vpop.f32.mrb[0].mxu0
      %722 = vmatprep.mubr.bf16.mxu0 0
      %723 = vmatmul.mubr.bf16.gmra.mrb[0].mxu0 %v608
      %v724 = vpop.f32.mrb[0].mxu0
      %v725 = vadd.f32 %v632, %v724
      %v726 = vpop.f32.mrb[0].mxu0
      %v727 = vpop.f32.mrb[0].mxu0
      %v728 = vadd.f32 %v632, %v727
      %v729 = vpop.f32.mrb[0].mxu0
      %730 = vmatprep.mubr.bf16.mxu0 0
      %731 = vmatmul.mubr.bf16.gmra.mrb[0].mxu0 %v609
      %v732 = vpop.f32.mrb[0].mxu0
      %v733 = vadd.f32 %v632, %v732
      %v734 = vpop.f32.mrb[0].mxu0
      %v735 = vpop.f32.mrb[0].mxu0
      %v736 = vadd.f32 %v632, %v735
      %v737 = vpop.f32.mrb[0].mxu0
      %738 = vmatprep.mubr.bf16.mxu0 0
      %739 = vmatmul.mubr.bf16.gmra.mrb[0].mxu0 %v610
      %v740 = vpop.f32.mrb[0].mxu0
      %v741 = vadd.f32 %v632, %v740
      %v742 = vpop.f32.mrb[0].mxu0
      %v743 = vpop.f32.mrb[0].mxu0
      %v744 = vadd.f32 %v632, %v743
      %v745 = vpop.f32.mrb[0].mxu0
      %746 = vdwg.mxu0
      %v747 = vxor.u32 %v717, 2147483648
      %v748 = vxor.u32 %v720, 2147483648
      %v749 = vxor.u32 %v725, 2147483648
      %v750 = vxor.u32 %v728, 2147483648
      %v751 = vxor.u32 %v733, 2147483648
      %v752 = vxor.u32 %v736, 2147483648
      %v753 = vxor.u32 %v741, 2147483648
      %v754 = vxor.u32 %v744, 2147483648
      %v755 = vmul.f32 %v747, 1.442695
      %v756 = vpow.pop %v755
      %v757 = vmul.f32 %v748, 1.442695
      %v758 = vpow.pop %v757
      %v759 = vmul.f32 %v749, 1.442695
      %v760 = vpow.pop %v759
      %v761 = vmul.f32 %v750, 1.442695
      %v762 = vpow.pop %v761
      %v763 = vmul.f32 %v751, 1.442695
      %v764 = vpow.pop %v763
      %v765 = vmul.f32 %v752, 1.442695
      %v766 = vpow.pop %v765
      %v767 = vmul.f32 %v753, 1.442695
      %v768 = vpow.pop %v767
      %v769 = vmul.f32 %v754, 1.442695
      %v770 = vpow.pop %v769
      %v771 = vadd.f32 %v756, 1.0
      %v772 = vadd.f32 %v758, 1.0
      %v773 = vadd.f32 %v760, 1.0
      %v774 = vadd.f32 %v762, 1.0
      %v775 = vadd.f32 %v764, 1.0
      %v776 = vadd.f32 %v766, 1.0
      %v777 = vadd.f32 %v768, 1.0
      %v778 = vadd.f32 %v770, 1.0
      %v779 = vrcp.pop %v771
      %v780 = vmul.f32 1.0, %v779
      %v781 = vrcp.pop %v772
      %v782 = vmul.f32 1.0, %v781
      %v783 = vrcp.pop %v773
      %v784 = vmul.f32 1.0, %v783
      %v785 = vrcp.pop %v774
      %v786 = vmul.f32 1.0, %v785
      %v787 = vrcp.pop %v775
      %v788 = vmul.f32 1.0, %v787
      %v789 = vrcp.pop %v776
      %v790 = vmul.f32 1.0, %v789
      %v791 = vrcp.pop %v777
      %v792 = vmul.f32 1.0, %v791
      %v793 = vrcp.pop %v778
      %v794 = vmul.f32 1.0, %v793
      %795 = vst [vmem:[%s280] sm:$0xff] %v780
      %796 = vst [vmem:[%s280 + $0x8] sm:$0xff] %v782
      %797 = vst [vmem:[%s280 + $0x10] sm:$0xff] %v784
      %798 = vst [vmem:[%s280 + $0x18] sm:$0xff] %v786
      %799 = vst [vmem:[%s280 + $0x20] sm:$0xff] %v788
      %800 = vst [vmem:[%s280 + $0x28] sm:$0xff] %v790
      %801 = vst [vmem:[%s280 + $0x30] sm:$0xff] %v792
      %802 = vst [vmem:[%s280 + $0x38] sm:$0xff] %v794
      %s803 = smul.u32 8, %s18
      %p804 = scmp.lt.s32.totalorder %s803, 15
      %s805 = scalar_select %p804, %s803, 15
      %s806 = smul.addr %s805, 8
      %s807 = scalar_lea.vmem %s7, %s806
      // Predicated region
      $region49: #{_lightfield_forward.1} parent=47 // pred_check
        %p808 = pneg %p188
      $region50: #{_lightfield_forward.1} parent=47 // pred_check_branch
        %810 = sbr.rel (%p808) target = $region52
      $region51: #{_lightfield_forward.1} parent=47 // pred_region
        %s811 = smul.u32 8, %s18
      $region52: #{_lightfield_forward.1} parent=47 // pred_fallthru
        _
    $region48: #{_lightfield_forward.1} parent=5 // pred_fallthru
      _
    %p812 = scmp.le.s32.totalorder 2, %s13
    // Predicated region
    $region53: #{_lightfield_forward.1} parent=5 // pred_check
      %p813 = pneg %p812
    $region54: #{_lightfield_forward.1} parent=5 // pred_check_branch
      %815 = sbr.rel (%p813) target = $region56
    $region55: #{_lightfield_forward.1} parent=5 // pred_region
      %s816 = ssub.s32 %s13, 2
      // Predicated region
      $region57: #{_lightfield_forward.1} parent=55 // pred_check
        %p817 = pneg %p194
      $region58: #{_lightfield_forward.1} parent=55 // pred_check_branch
        %819 = sbr.rel (%p817) target = $region60
      $region59: #{_lightfield_forward.1} parent=55 // pred_region
        %s820 = smul.u32 8, %s19
        %p821 = scmp.lt.s32.totalorder %s820, 15
        %s822 = scalar_select %p821, %s820, 15
        %s823 = smul.addr %s822, 8
        %s824 = scalar_lea.vmem %s7, %s823
      $region60: #{_lightfield_forward.1} parent=55 // pred_fallthru
        _
    $region56: #{_lightfield_forward.1} parent=5 // pred_fallthru
      _
  $region6: #{_lightfield_forward.1} parent=0 // loop_footer
    %s17 = sadd.s32 1, %s13
  $region7: #{_lightfield_forward.1} parent=0 // loop_footer_branch
    %12 = sbr.rel target = $region3
  $region8: #{_lightfield_forward.1} parent=0 // loop_exit
    _

</llo_original>
